<compile_context>
chip_gen: v7x
topology: tpu7x:2x2x1
jax: 0.10.0
libtpu: 0.0.40
codegen_flags: <defaults>
</compile_context>

<pallas_src>
import math
import functools
from types import SimpleNamespace

import jax
import jax.numpy as jnp
from jax import lax
from jax.experimental import pallas as pl
from jax.experimental.pallas import tpu as pltpu


def _silu(v):
    return v * jax.nn.sigmoid(v)


# ------------------------- pltpu.roll convention probe -------------------------

def _roll_probe_kernel(x_ref, o_ref):
    o_ref[...] = pltpu.roll(x_ref[...], 1, 1)


_ROLL_LIKE_JNP = None


def _roll_like_jnp():
    """True iff pltpu.roll follows jnp.roll's convention (rolled[i] = x[i - shift])."""
    global _ROLL_LIKE_JNP
    if _ROLL_LIKE_JNP is None:
        with jax.ensure_compile_time_eval():
            x = jnp.arange(8 * 128, dtype=jnp.float32).reshape(8, 128)
            y = pl.pallas_call(
                _roll_probe_kernel,
                out_shape=jax.ShapeDtypeStruct((8, 128), jnp.float32))(x)
            _ROLL_LIKE_JNP = bool(jnp.allclose(y, jnp.roll(x, 1, axis=1)))
    return _ROLL_LIKE_JNP


# ----------------------------- fused head kernel -----------------------------

def _make_fused_kernel(*, H, W, B, Cin, Cxe, Cpass, nf, cout, temb_dim, nblocks,
                       Gxe, Gnf, normalize_xemb, apply_act_before_res,
                       res_scale, gn_eps, roll_like_jnp):
    """Whole GENIEPredictionHead forward for one batch block; VMEM-resident."""
    HW = H * W
    L = B * HW
    f32 = jnp.float32

    def kernel(*refs):
        it = iter(refs)
        hin_ref = next(it)                        # (Cin, L)
        temb_ref = next(it)                       # (temb_dim, B)
        if normalize_xemb:
            gnx_g = next(it); gnx_b = next(it)    # (Cin, 1)  (identity on non-xemb rows)
        ci_w = next(it); ci_b = next(it)          # (nf, 9*Cin), (nf, 1)
        blocks = [tuple(next(it) for _ in range(10)) for _ in range(nblocks)]
        go_g = next(it); go_b = next(it)          # (nf, 1)
        co_w = next(it); co_b = next(it)          # (cout, 9*nf), (cout, 1)
        out_ref = next(it)                        # (cout, L)

        iota = lambda shape, d: lax.broadcasted_iota(jnp.int32, shape, d)

        # ------- compile-time constants (rebuilt per grid step; cheap VPU) -------
        lane = iota((1, L), 1)
        pix = lane % HW
        py, px = pix // W, pix % W

        # batch-segment one-hots: lane l belongs to sample l // HW
        seg = ((iota((L, B), 0) // HW) == iota((L, B), 1)).astype(f32)     # (L, B)
        segT = ((iota((B, L), 1) // HW) == iota((B, L), 0)).astype(f32)    # (B, L)

        # 3x3 tap validity masks (None == centre tap, always valid)
        tap_masks = []
        for ky in range(3):
            for kx in range(3):
                dy, dx = ky - 1, kx - 1
                if dy == 0 and dx == 0:
                    tap_masks.append(None)
                else:
                    yy, xx = py + dy, px + dx
                    tap_masks.append((yy >= 0) & (yy < H) & (xx >= 0) & (xx < W))

        def group_mats(C, G, cg, coff=0):
            # Stacked block-diagonal one-hots so [x; x*x] / [mean; rstd] each need
            # a single MXU push.  Channels outside [coff, coff + G*cg) belong to
            # no group (pass-through handled via `pass_mask`).
            def onehot(rows, cols, row_is_group):
                r, c = iota((rows, cols), 0), iota((rows, cols), 1)
                if row_is_group:
                    g, ch, halves = r % G, c % C, (r // G) == (c // C)
                else:
                    g, ch, halves = c % G, r % C, (r // C) == (c // G)
                ok = halves & (ch >= coff) & (ch < coff + G * cg) & (((ch - coff) // cg) == g)
                return ok.astype(f32)
            return onehot(2 * G, 2 * C, True), onehot(2 * C, 2 * G, False)

        def group_norm(h, gamma, beta, gm_gc, gm_cg, G, cnt, pass_mask=None):
            # torch.nn.GroupNorm semantics (biased variance, contiguous groups),
            # computed per sample segment of the lane axis.
            C = h.shape[0]
            stats = jnp.concatenate([h, h * h], axis=0)                        # (2C, L)
            red = jnp.dot(stats, seg, preferred_element_type=f32)              # (2C, B)
            grp = jnp.dot(gm_gc, red, preferred_element_type=f32) * (1.0 / cnt)  # (2G, B)
            mean_g = grp[:G]
            rstd_g = lax.rsqrt(grp[G:] - mean_g * mean_g + gn_eps)
            mi = jnp.dot(gm_cg, jnp.concatenate([mean_g, rstd_g], axis=0),
                         preferred_element_type=f32)                            # (2C, B)
            a_cb = gamma * mi[C:]                                               # gamma * rstd
            sh_cb = beta - mi[:C] * a_cb                                        # beta - mean*gamma*rstd
            ab = jnp.dot(jnp.concatenate([a_cb, sh_cb], axis=0), segT,
                         preferred_element_type=f32)                            # (2C, L)
            scale = ab[:C]
            if pass_mask is not None:
                scale = scale + pass_mask                                       # identity rows
            return h * scale + ab[C:]

        def conv3x3(h, w_t, bias):
            # im2col: single (Cout, 9C) x (9C, L) MXU matmul per conv.
            hm = h.astype(w_t.dtype)
            taps = []
            for t, mask in enumerate(tap_masks):
                off = (t // 3 - 1) * W + (t % 3 - 1)
                shift = ((-off) if roll_like_jnp else off) % L
                tap = hm if shift == 0 else pltpu.roll(hm, shift, 1)
                if mask is not None:
                    tap = jnp.where(mask, tap, 0)                               # NaN-safe zeroing
                taps.append(tap)
            patches = jnp.concatenate(taps, axis=0)                             # (9C, L)
            return jnp.dot(w_t, patches, preferred_element_type=f32) + bias

        # ------------------------------- forward -------------------------------
        h = hin_ref[...].astype(f32)                                            # (Cin, L)

        if normalize_xemb:
            gm_gc_xe, gm_cg_xe = group_mats(Cin, Gxe, Cxe // Gxe, coff=Cpass)
            ch = iota((Cin, 1), 0)
            pass_mask = ((ch < Cpass) | (ch >= Cpass + Cxe)).astype(f32)
            h = group_norm(h, gnx_g[...], gnx_b[...], gm_gc_xe, gm_cg_xe, Gxe,
                           float(HW * (Cxe // Gxe)), pass_mask=pass_mask)

        h = conv3x3(h, ci_w[...], ci_b[...])
        if apply_act_before_res:
            h = _silu(h)

        # temb projections Dense(SiLU(temb)) hoisted out of the residual loop,
        # broadcast per sample segment, folded into conv0's bias below.
        t_act = _silu(temb_ref[...].astype(f32))                                # (temb_dim, B)
        temb_bias = []
        for blk in blocks:
            dw, db = blk[4], blk[5]
            tb = jnp.dot(dw[...], t_act, preferred_element_type=f32) + db[...]  # (nf, B)
            temb_bias.append(jnp.dot(tb, segT, preferred_element_type=f32))     # (nf, L)

        gm_gc, gm_cg = group_mats(nf, Gnf, nf // Gnf)
        cnt_nf = float(HW * (nf // Gnf))

        for bi, (g0g, g0b, c0w, c0b, _dw, _db, g1g, g1b, c1w, c1b) in enumerate(blocks):
            skip = h
            hb = _silu(group_norm(h, g0g[...], g0b[...], gm_gc, gm_cg, Gnf, cnt_nf))
            hb = conv3x3(hb, c0w[...], c0b[...] + temb_bias[bi])
            hb = _silu(group_norm(hb, g1g[...], g1b[...], gm_gc, gm_cg, Gnf, cnt_nf))
            # Dropout_0 is identity in eval mode.
            hb = conv3x3(hb, c1w[...], c1b[...])
            h = (skip + hb) * res_scale

        h = _silu(group_norm(h, go_g[...], go_b[...], gm_gc, gm_cg, Gnf, cnt_nf))
        out_ref[...] = conv3x3(h, co_w[...], co_b[...]).astype(out_ref.dtype)

    return kernel


# ----------------------------- head forward wrapper -----------------------------

def genie_prediction_head(params, cfg, x, eps, xemb, temb, context=None,
                          mxu_dtype=jnp.bfloat16):
    """GENIEPredictionHead forward (eval mode) as one fused Pallas TPU call."""
    # TODO(synk): upsampler path (resize_fn + context concat) not implemented.
    assert context is None and not cfg.is_upsampler

    N, Cx, H, W = x.shape
    Ce, Cxe = eps.shape[1], xemb.shape[1]
    HW = H * W
    nf, cout = cfg.nf, cfg.num_out_channels
    temb_dim = temb.shape[1]
    nblocks = cfg.num_res_blocks
    Gxe = min(Cxe // 4, 32)
    Gnf = min(nf // 4, 32)
    Cpass = Cx + Ce
    Cin_raw = Cpass + Cxe
    Cin = ((Cin_raw + 7) // 8) * 8            # pad channels to a sublane multiple
    f32 = jnp.float32

    # Pack samples onto the lane axis until lanes are (close to) full.
    # (On v7x one could halve B_blk to keep >= 2 grid steps for the 2 TCs.)
    target = max(1, 128 // HW)
    B_blk = 1
    for d in range(1, min(N, target) + 1):
        if N % d == 0:
            B_blk = d
    Nb = N // B_blk
    L = B_blk * HW

    # channels-on-sublanes, (batch * pixels)-on-lanes activation layout
    h = jnp.concatenate([x, eps, xemb], axis=1).astype(f32)            # (N, Cin_raw, H, W)
    if Cin > Cin_raw:
        h = jnp.pad(h, ((0, 0), (0, Cin - Cin_raw), (0, 0), (0, 0)))
    h = h.reshape(Nb, B_blk, Cin, HW).transpose(0, 2, 1, 3).reshape(Nb, Cin, L)
    temb_t = temb.astype(f32).reshape(Nb, B_blk, temb_dim).transpose(0, 2, 1)   # (Nb, temb_dim, B_blk)

    def conv_wT(w_oihw, ci_pad):
        # torch OIHW (Co, Ci, 3, 3) -> (Co, 9*ci_pad), rows ordered (ky, kx, ci)
        co, ci = w_oihw.shape[0], w_oihw.shape[1]
        w = jnp.transpose(w_oihw, (2, 3, 1, 0))                        # (ky, kx, ci, co)
        if ci_pad > ci:
            w = jnp.pad(w, ((0, 0), (0, 0), (0, ci_pad - ci), (0, 0)))
        return jnp.transpose(w.reshape(9 * ci_pad, co)).astype(mxu_dtype)

    col = lambda v: v.reshape(-1, 1).astype(f32)

    inputs = [h, temb_t]
    in_specs = [
        pl.BlockSpec((None, Cin, L), lambda n: (n, 0, 0)),
        pl.BlockSpec((None, temb_dim, B_blk), lambda n: (n, 0, 0)),
    ]

    def add_param(a):                      # whole array resident; constant index map
        inputs.append(a)
        in_specs.append(pl.BlockSpec(a.shape, lambda n: (0,) * a.ndim))

    if cfg.normalize_xemb:
        add_param(col(jnp.concatenate([jnp.ones((Cpass,), f32), params["gn_xemb_gamma"],
                                       jnp.ones((Cin - Cin_raw,), f32)])))
        add_param(col(jnp.concatenate([jnp.zeros((Cpass,), f32), params["gn_xemb_beta"],
                                       jnp.zeros((Cin - Cin_raw,), f32)])))

    add_param(conv_wT(params["conv_in_w"], Cin)); add_param(col(params["conv_in_b"]))
    for blk in params["blocks"]:
        add_param(col(blk["gn0_gamma"])); add_param(col(blk["gn0_beta"]))
        add_param(conv_wT(blk["conv0_w"], nf)); add_param(col(blk["conv0_b"]))
        add_param(blk["dense_w"].astype(f32)); add_param(col(blk["dense_b"]))
        add_param(col(blk["gn1_gamma"])); add_param(col(blk["gn1_beta"]))
        add_param(conv_wT(blk["conv1_w"], nf)); add_param(col(blk["conv1_b"]))
    add_param(col(params["gn_out_gamma"])); add_param(col(params["gn_out_beta"]))
    add_param(conv_wT(params["conv_out_w"], nf)); add_param(col(params["conv_out_b"]))

    kernel = _make_fused_kernel(
        H=H, W=W, B=B_blk, Cin=Cin, Cxe=Cxe, Cpass=Cpass, nf=nf, cout=cout,
        temb_dim=temb_dim, nblocks=nblocks, Gxe=Gxe, Gnf=Gnf,
        normalize_xemb=cfg.normalize_xemb,
        apply_act_before_res=cfg.apply_act_before_res,
        res_scale=(1.0 / math.sqrt(2.0)) if cfg.skip_rescale else 1.0,
        gn_eps=1e-6, roll_like_jnp=_roll_like_jnp())

    out = pl.pallas_call(
        kernel,
        out_shape=jax.ShapeDtypeStruct((Nb, cout, L), x.dtype),
        grid=(Nb,),
        in_specs=in_specs,
        out_specs=pl.BlockSpec((None, cout, L), lambda n: (n, 0, 0)),
        compiler_params=pltpu.CompilerParams(dimension_semantics=("parallel",)),
    )(*inputs)

    out = out.reshape(Nb, cout, B_blk, HW).transpose(0, 2, 1, 3)
    return out.reshape(N, cout, H, W)


# ----------------------------- pure-JAX reference -----------------------------

def _group_norm_ref(x, gamma, beta, groups, eps=1e-6):
    N, C, H, W = x.shape
    xg = x.reshape(N, groups, C // groups, H, W)
    mean = xg.mean(axis=(2, 3, 4), keepdims=True)
    var = ((xg - mean) ** 2).mean(axis=(2, 3, 4), keepdims=True)
    xg = (xg - mean) / jnp.sqrt(var + eps)
    return xg.reshape(N, C, H, W) * gamma.reshape(1, C, 1, 1) + beta.reshape(1, C, 1, 1)


def _conv3x3_ref(x, w_oihw, b):
    y = lax.conv_general_dilated(x, w_oihw, (1, 1), ((1, 1), (1, 1)),
                                 dimension_numbers=("NCHW", "OIHW", "NCHW"))
    return y + b.reshape(1, -1, 1, 1)


def genie_prediction_head_ref(params, cfg, x, eps, xemb, temb):
    gnf = min(cfg.nf // 4, 32)
    if cfg.normalize_xemb:
        xemb = _group_norm_ref(xemb, params["gn_xemb_gamma"], params["gn_xemb_beta"],
                               min(xemb.shape[1] // 4, 32))
    h = jnp.concatenate([x, eps, xemb], axis=1)
    h = _conv3x3_ref(h, params["conv_in_w"], params["conv_in_b"])
    if cfg.apply_act_before_res:
        h = _silu(h)
    for blk in params["blocks"]:
        skip = h
        hb = _silu(_group_norm_ref(h, blk["gn0_gamma"], blk["gn0_beta"], gnf))
        hb = _conv3x3_ref(hb, blk["conv0_w"], blk["conv0_b"])
        hb = hb + (_silu(temb) @ blk["dense_w"].T + blk["dense_b"])[:, :, None, None]
        hb = _silu(_group_norm_ref(hb, blk["gn1_gamma"], blk["gn1_beta"], gnf))
        hb = _conv3x3_ref(hb, blk["conv1_w"], blk["conv1_b"])
        h = (skip + hb) / math.sqrt(2.0) if cfg.skip_rescale else skip + hb
    h = _silu(_group_norm_ref(h, params["gn_out_gamma"], params["gn_out_beta"], gnf))
    return _conv3x3_ref(h, params["conv_out_w"], params["conv_out_b"])


# ------------------------ deterministic synthetic params ------------------------

def init_params(key, cfg, temb_dim):
    nf, cin, cout = cfg.nf, cfg.num_in_channels, cfg.num_out_channels
    cxe = cin - 6
    ks = iter(jax.random.split(key, 128))
    conv_w = lambda k, co, ci, s=0.05: jax.random.normal(k, (co, ci, 3, 3), jnp.float32) * s
    gnp = lambda k, c: (1.0 + 0.1 * jax.random.normal(k, (c,), jnp.float32),
                        0.1 * jax.random.normal(next(ks), (c,), jnp.float32))
    bias = lambda k, c: 0.1 * jax.random.normal(k, (c,), jnp.float32)

    gx_g, gx_b = gnp(next(ks), cxe)
    go_g, go_b = gnp(next(ks), nf)
    p = {
        "gn_xemb_gamma": gx_g, "gn_xemb_beta": gx_b,
        "conv_in_w": conv_w(next(ks), nf, cin), "conv_in_b": bias(next(ks), nf),
        "gn_out_gamma": go_g, "gn_out_beta": go_b,
        "conv_out_w": conv_w(next(ks), cout, nf), "conv_out_b": bias(next(ks), cout),
        "blocks": [],
    }
    for _ in range(cfg.num_res_blocks):
        g0g, g0b = gnp(next(ks), nf)
        g1g, g1b = gnp(next(ks), nf)
        p["blocks"].append({
            "gn0_gamma": g0g, "gn0_beta": g0b,
            "conv0_w": conv_w(next(ks), nf, nf), "conv0_b": bias(next(ks), nf),
            "dense_w": jax.random.normal(next(ks), (nf, temb_dim), jnp.float32) * 0.05,
            "dense_b": bias(next(ks), nf),
            "gn1_gamma": g1g, "gn1_beta": g1b,
            "conv1_w": conv_w(next(ks), nf, nf), "conv1_b": bias(next(ks), nf),
        })
    return p


# ----------------------------------- main -----------------------------------

if __name__ == "__main__":
    cfg = SimpleNamespace(
        normalize_xemb=True, apply_act_before_res=True, nf=32, num_res_blocks=2,
        dropout=0.0, fir=False, fir_kernel=(1, 3, 3, 1), skip_rescale=True,
        init_scale=0.0, image_size=8, is_upsampler=False,
        num_in_channels=14,      # 3 (x) + 3 (eps) + 8 (xemb)
        num_out_channels=3)
    N, Hs, Ws = 2, 8, 8
    C_xemb = cfg.num_in_channels - 6
    temb_dim = C_xemb * 4        # matches the module's temb_dim formula

    key = jax.random.PRNGKey(0)
    kp, kx, ke, kxe, kt = jax.random.split(key, 5)
    params = init_params(kp, cfg, temb_dim)

    x = jax.random.normal(kx, (N, 3, Hs, Ws), jnp.float32)
    eps_in = jax.random.normal(ke, (N, 3, Hs, Ws), jnp.float32)
    xemb = jax.random.normal(kxe, (N, C_xemb, Hs, Ws), jnp.float32)
    temb = jax.random.normal(kt, (N, temb_dim), jnp.float32)

    _roll_like_jnp()             # prime the roll-convention probe outside jit

    fwd = jax.jit(functools.partial(genie_prediction_head, params, cfg))
    out = jax.block_until_ready(fwd(x, eps_in, xemb, temb))
    assert out.shape == (N, cfg.num_out_channels, Hs, Ws), out.shape
    assert bool(jnp.all(jnp.isfinite(out)))

    ref = genie_prediction_head_ref(params, cfg, x, eps_in, xemb, temb)
    err = float(jnp.max(jnp.abs(out - ref)))
    scale = float(jnp.max(jnp.abs(ref)))
    assert err <= 0.1 + 0.05 * scale, (err, scale)   # loose bound: bf16 MXU operands
    print("KERNEL_OK")
</pallas_src>

<mosaic_0001>
module attributes {stable_mosaic.version = 11 : i64} {
  func.func @_roll_probe_kernel(%arg0: memref<8x128xf32, #tpu.memory_space<vmem>>, %arg1: memref<8x128xf32, #tpu.memory_space<vmem>>) attributes {dimension_semantics = [], scalar_prefetch = 0 : i64, scratch_operands = 0 : i64, tpu.core_type = #tpu.core_type<tc>} {
    %c0 = arith.constant 0 : index
    %c0_0 = arith.constant 0 : index
    %0 = vector.load %arg0[%c0, %c0_0] : memref<8x128xf32, #tpu.memory_space<vmem>>, vector<8x128xf32>
    %c1_i32 = arith.constant 1 : i32
    %1 = tpu.dynamic_rotate %0 by %c1_i32 dim 1 : vector<8x128xf32>, i32 -> vector<8x128xf32>
    %c0_1 = arith.constant 0 : index
    %c0_2 = arith.constant 0 : index
    %2 = vector.load %arg1[%c0_1, %c0_2] : memref<8x128xf32, #tpu.memory_space<vmem>>, vector<8x128xf32>
    tpu.vector_store %arg1[%c0_1, %c0_2], %1 {strides = array<i32>} : memref<8x128xf32, #tpu.memory_space<vmem>>, vector<8x128xf32>,
    return
  }
}

</mosaic_0001>

<llo_original>
// kernel: tpu_custom_call.1
$region0: #{tpu_custom_call.1}
  #allocation0 [shape = 'u32[]', space=smem, size = 0x4, offset = 0x4, fixed_abs, tag = 'smem constant byte address 0x4 - core index']
  #allocation1 [shape = 'u32[144,128]{1,0:T(1,128)}', space=vmem, size = 0x12000, scoped, tag = 'internal scratch']
  %s0 = inlined_call_operand.hbm [shape: f32[8,128], index: 0, kind: input, shape index: {}]
  %s1 = inlined_call_operand.hbm [shape: f32[8,128], index: 1, kind: output, shape index: {}]
  %s2 = sld [smem:[#allocation0]]
  $region18: #{tpu_custom_call.1} parent=0
    _
  %s4 = ssub.s32 1, %s2
  %s5 = scalar_select 0, %s4, %s2
  $region1: #{tpu_custom_call.1} parent=0
    #allocation2 [shape = 'u8[4096]{0}', space=vmem, size = 0x1000, scoped, tag = 'input window, operand 0, single buffered']
    #allocation3 [shape = 's32[1]{0}', space=sflag, size = 0x4, scoped, tag = 'scoped memory for tpu_custom_call.1']
    #allocation4 [shape = 's32[1]{0}', space=sflag, size = 0x4, scoped, tag = 'scoped memory for tpu_custom_call.1']
    #allocation5 [shape = 'u8[4096]{0}', space=vmem, size = 0x1000, scoped, tag = 'output window, operand 0, single buffered']
    %6 = vsyncpa [#allocation3], 0
    %7 = vsyncpa [#allocation4], 0
    // Predicated region
    $region2: #{tpu_custom_call.1} parent=1 // pred_check
      _
    $region3: #{tpu_custom_call.1} parent=1 // pred_check_branch
      %9 = sbr.rel (0) target = $region5
    $region4: #{tpu_custom_call.1} parent=1 // pred_region
      %s11 = ssub.s32 128, 128
      %12 = vsyncadd [#allocation3], %s11
      %s14 = sshll.u32 [#allocation2], 4
      %s15 = int_to_ptr.vmem [resolvable:$true] %s14
      %17 = dma.hbm_to_vmem [thread:$0]  %s0, 128, %s15, [#allocation3]
    $region5: #{tpu_custom_call.1} parent=1 // pred_fallthru
      _
    // Predicated region
    $region6: #{tpu_custom_call.1} parent=1 // pred_check
      _
    $region7: #{tpu_custom_call.1} parent=1 // pred_check_branch
      %19 = sbr.rel (0) target = $region9
    $region8: #{tpu_custom_call.1} parent=1 // pred_region
      %20 = dma.done [#allocation3], 128
    $region9: #{tpu_custom_call.1} parent=1 // pred_fallthru
      _
    %v21 = vld [vmem:[#allocation2] sm:$0xff]
    %22 = vrot.lane.b32.xlu0 %v21, 1
    %v23 = vpop.permute.xlu0 %22
    %24 = vst [vmem:[#allocation5] sm:$0xff] %v23
    // Predicated region
    $region10: #{tpu_custom_call.1} parent=1 // pred_check
      _
    $region11: #{tpu_custom_call.1} parent=1 // pred_check_branch
      %26 = sbr.rel (0) target = $region13
    $region12: #{tpu_custom_call.1} parent=1 // pred_region
      %s28 = ssub.s32 128, 128
      %29 = vsyncadd [#allocation4], %s28
      %s31 = sshll.u32 [#allocation5], 4
      %s32 = int_to_ptr.vmem [resolvable:$true] %s31
      %34 = dma.vmem_to_hbm [thread:$0]  %s32, 128, %s1, [#allocation4]
    $region13: #{tpu_custom_call.1} parent=1 // pred_fallthru
      _
    // Predicated region
    $region14: #{tpu_custom_call.1} parent=1 // pred_check
      _
    $region15: #{tpu_custom_call.1} parent=1 // pred_check_branch
      %36 = sbr.rel (0) target = $region17
    $region16: #{tpu_custom_call.1} parent=1 // pred_region
      %37 = dma.done [#allocation4], 128
    $region17: #{tpu_custom_call.1} parent=1 // pred_fallthru
      _
    %38 = vsyncpa [#allocation3], 1
    %39 = vsyncpa [#allocation4], 1

</llo_original>
